<compile_context>
chip_gen: v5e
topology: v5e:2x2
jax: 0.10.0
libtpu: 0.0.40
codegen_flags: <defaults>
</compile_context>

<pallas_src>
import jax
import jax.numpy as jnp
from jax.experimental import pallas as pl
from jax.experimental.pallas import tpu as pltpu


HIDDEN1 = 16
HIDDEN2 = 32
LANES = 128       # TPU lane width
SUBLANES = 8      # f32 sublane tile


def _round_up(x, m):
    return (x + m - 1) // m * m


# --------------------------------------------------------------------------
# Kernel: fused fc1 -> relu -> fc2 -> relu on one (TB, D) activation tile.
# --------------------------------------------------------------------------
def _mlp_kernel(x_ref, w1_ref, b1_ref, w2_ref, b2_ref, o_ref):
    x = x_ref[...].astype(w1_ref.dtype)            # in-kernel cast (no-op for f32)
    # fc1 (MXU, f32 accumulate) + bias + ReLU -> (TB, 128) hidden slab
    h = jnp.dot(x, w1_ref[...], preferred_element_type=jnp.float32)
    h = jnp.maximum(h + b1_ref[...], 0.0)
    # fc2 (MXU, f32 accumulate) + bias + ReLU -> (TB, 32) output
    y = jnp.dot(h.astype(w2_ref.dtype), w2_ref[...],
                preferred_element_type=jnp.float32)
    y = jnp.maximum(y + b2_ref[...], 0.0)
    o_ref[...] = y.astype(o_ref.dtype)


# --------------------------------------------------------------------------
# One-time parameter preparation (hoisted out of the per-step forward).
# --------------------------------------------------------------------------
def prepare_params(w1, b1, w2, b2, *, param_dtype=jnp.float32):
    """w1: (D, 16), b1: (16,), w2: (16, 32), b2: (32,).

    Pads the hidden dim 16 -> 128 (lane-dense intermediate, exact zeros) and
    casts weights once.  x itself is never padded/cast in the wrapper.
    """
    D, H1 = w1.shape
    H1_w, H2 = w2.shape
    assert H1 == H1_w == HIDDEN1 and H2 == HIDDEN2
    Hp = LANES
    w1p = jnp.pad(w1, ((0, 0), (0, Hp - H1))).astype(param_dtype)        # (D, 128)
    b1p = jnp.pad(b1.reshape(1, H1), ((0, 0), (0, Hp - H1)))             # (1, 128) f32
    w2p = jnp.pad(w2, ((0, Hp - H1), (0, 0))).astype(param_dtype)        # (128, 32)
    b2p = b2.reshape(1, H2).astype(jnp.float32)                          # (1, 32) f32
    return w1p, b1p.astype(jnp.float32), w2p, b2p


def _choose_tiles(B, D, itemsize, block_b):
    """Pick (TB, n_tiles, Bp): even #tiles for v7x 2-TC balance, low pad waste,
    and a double-buffered x tile under ~20 MiB (v7x 32 MiB scoped VMEM)."""
    n = max(2, pl.cdiv(B, block_b))
    if n % 2:
        n += 1                                   # even split across 2 TensorCores
    TB = _round_up(pl.cdiv(B, n), SUBLANES)
    # VMEM guard: 2 (double buffer) * TB * D * itemsize must leave headroom.
    budget = 20 * 1024 * 1024
    max_tb = max(SUBLANES, (budget // (2 * max(D, 1) * itemsize)) // SUBLANES * SUBLANES)
    if TB > max_tb:
        TB = max_tb
        n = pl.cdiv(B, TB)
        if n % 2:
            n += 1
    return TB, n, TB * n


# --------------------------------------------------------------------------
# Forward wrapper.
# --------------------------------------------------------------------------
def simple_module_forward(x, params, *, block_b=1024):
    """x: (B, D) float; params from prepare_params().  Returns (B, 32) f32."""
    w1p, b1p, w2p, b2p = params
    B, D = x.shape
    assert w1p.shape[0] == D
    H2 = b2p.shape[-1]

    if B <= block_b:
        # --- Small-batch path: single invocation, no grid, no pipeline. ---
        Bp = _round_up(B, SUBLANES)
        xp = jnp.pad(x, ((0, Bp - B), (0, 0))) if Bp != B else x
        vmem = pl.BlockSpec(memory_space=pltpu.MemorySpace.VMEM)
        out = pl.pallas_call(
            _mlp_kernel,
            out_shape=jax.ShapeDtypeStruct((Bp, H2), jnp.float32),
            in_specs=[vmem, vmem, vmem, vmem, vmem],
            out_specs=vmem,
        )(xp, w1p, b1p, w2p, b2p)
    else:
        # --- Batch-tiled path: grid over batch, weights resident in VMEM. ---
        TB, n_tiles, Bp = _choose_tiles(B, D, jnp.dtype(x.dtype).itemsize, block_b)
        xp = jnp.pad(x, ((0, Bp - B), (0, 0))) if Bp != B else x
        out = pl.pallas_call(
            _mlp_kernel,
            out_shape=jax.ShapeDtypeStruct((Bp, H2), jnp.float32),
            grid=(n_tiles,),
            in_specs=[
                # x streamed unpadded: last block dim == full array dim D.
                # (If x-DMA ever shows exposed in xprof, add
                #  pipeline_mode=pl.Buffered(3) here.)
                pl.BlockSpec((TB, D), lambda i: (i, 0)),
                pl.BlockSpec(w1p.shape, lambda i: (0, 0)),   # resident
                pl.BlockSpec(b1p.shape, lambda i: (0, 0)),   # resident
                pl.BlockSpec(w2p.shape, lambda i: (0, 0)),   # resident
                pl.BlockSpec(b2p.shape, lambda i: (0, 0)),   # resident
            ],
            out_specs=pl.BlockSpec((TB, H2), lambda i: (i, 0)),
            compiler_params=pltpu.CompilerParams(
                dimension_semantics=("parallel",),           # 2 TCs on v7x
            ),
        )(xp, w1p, b1p, w2p, b2p)

    return out[:B] if Bp != B else out


# --------------------------------------------------------------------------
# Init / reference / self-test.
# --------------------------------------------------------------------------
def init_params(key, input_size):
    """torch.nn.Linear-style init U(-1/sqrt(fan_in), +); weights stored as (in, out)."""
    k1, k2, k3, k4 = jax.random.split(key, 4)
    bound1 = 1.0 / jnp.sqrt(input_size)
    bound2 = 1.0 / jnp.sqrt(HIDDEN1)
    w1 = jax.random.uniform(k1, (input_size, HIDDEN1), jnp.float32, -bound1, bound1)
    b1 = jax.random.uniform(k2, (HIDDEN1,), jnp.float32, -bound1, bound1)
    w2 = jax.random.uniform(k3, (HIDDEN1, HIDDEN2), jnp.float32, -bound2, bound2)
    b2 = jax.random.uniform(k4, (HIDDEN1 * 2,), jnp.float32, -bound2, bound2)
    return w1, b1, w2, b2


def _reference(x, w1, b1, w2, b2):
    h = jnp.maximum(x @ w1 + b1, 0.0)
    return jnp.maximum(h @ w2 + b2, 0.0)


if __name__ == "__main__":
    batch_size = 8
    input_size = 32

    key = jax.random.PRNGKey(0)
    kx, kp, kb = jax.random.split(key, 3)
    x = jax.random.normal(kx, (batch_size, input_size), jnp.float32)
    w1, b1, w2, b2 = init_params(kp, input_size)

    # Pad/cast weights ONCE (hoisted out of the forward).
    params = prepare_params(w1, b1, w2, b2)

    # 1) Small-batch path (no grid, whole operands in VMEM), f32.
    out = simple_module_forward(x, params)
    jax.block_until_ready(out)
    ref = _reference(x, w1, b1, w2, b2)
    assert out.shape == (batch_size, HIDDEN2)
    assert jnp.allclose(out, ref, atol=1e-5, rtol=1e-5)

    # 2) Batch-tiled path: adaptive tiles, even grid, unpadded x, 32-wide out.
    big_b = 3000  # not a multiple of the tile -> exercises row padding / slice
    xb = jax.random.normal(kb, (big_b, input_size), jnp.float32)
    out_big = simple_module_forward(xb, params, block_b=1024)
    jax.block_until_ready(out_big)
    ref_big = _reference(xb, w1, b1, w2, b2)
    assert out_big.shape == (big_b, HIDDEN2)
    assert jnp.allclose(out_big, ref_big, atol=1e-4, rtol=1e-4)

    # 3) bf16 weights (f32 accumulate); x stays f32 and is cast in-kernel.
    params_bf16 = prepare_params(w1, b1, w2, b2, param_dtype=jnp.bfloat16)
    out_bf16 = simple_module_forward(xb, params_bf16, block_b=1024)
    jax.block_until_ready(out_bf16)
    assert out_bf16.shape == (big_b, HIDDEN2)
    assert jnp.allclose(out_bf16, ref_big, atol=5e-2, rtol=5e-2)

    print("KERNEL_OK")
</pallas_src>

<mosaic_0001>
module attributes {stable_mosaic.version = 11 : i64} {
  func.func @_mlp_kernel(%arg0: memref<8x32xf32, #tpu.memory_space<vmem>>, %arg1: memref<32x128xf32, #tpu.memory_space<vmem>>, %arg2: memref<1x128xf32, #tpu.memory_space<vmem>>, %arg3: memref<128x32xf32, #tpu.memory_space<vmem>>, %arg4: memref<1x32xf32, #tpu.memory_space<vmem>>, %arg5: memref<8x32xf32, #tpu.memory_space<vmem>>) attributes {dimension_semantics = [], scalar_prefetch = 0 : i64, scratch_operands = 0 : i64, tpu.core_type = #tpu.core_type<tc>} {
    %c0 = arith.constant 0 : index
    %c0_0 = arith.constant 0 : index
    %0 = vector.load %arg0[%c0, %c0_0] : memref<8x32xf32, #tpu.memory_space<vmem>>, vector<8x32xf32>
    %c0_1 = arith.constant 0 : index
    %c0_2 = arith.constant 0 : index
    %1 = vector.load %arg1[%c0_1, %c0_2] : memref<32x128xf32, #tpu.memory_space<vmem>>, vector<32x128xf32>
    %cst = arith.constant dense<0.000000e+00> : vector<8x128xf32>
    %2 = tpu.matmul %0, %1, %cst {dimension_numbers = #tpu.dot_dimension_numbers<[1], [0], [0], [1], [0, 0, 1, 1], [], []>} : vector<8x32xf32>, vector<32x128xf32>, vector<8x128xf32> -> vector<8x128xf32>
    %c0_3 = arith.constant 0 : index
    %c0_4 = arith.constant 0 : index
    %3 = vector.load %arg2[%c0_3, %c0_4] : memref<1x128xf32, #tpu.memory_space<vmem>>, vector<1x128xf32>
    %4 = vector.broadcast %3 : vector<1x128xf32> to vector<8x128xf32>
    %5 = arith.addf %2, %4 : vector<8x128xf32>
    %cst_5 = arith.constant 0.000000e+00 : f32
    %6 = vector.broadcast %cst_5 : f32 to vector<8x128xf32>
    %7 = arith.maximumf %5, %6 : vector<8x128xf32>
    %c0_6 = arith.constant 0 : index
    %c0_7 = arith.constant 0 : index
    %8 = vector.load %arg3[%c0_6, %c0_7] : memref<128x32xf32, #tpu.memory_space<vmem>>, vector<128x32xf32>
    %cst_8 = arith.constant dense<0.000000e+00> : vector<8x32xf32>
    %9 = tpu.matmul %7, %8, %cst_8 {dimension_numbers = #tpu.dot_dimension_numbers<[1], [0], [0], [1], [0, 0, 1, 1], [], []>} : vector<8x128xf32>, vector<128x32xf32>, vector<8x32xf32> -> vector<8x32xf32>
    %c0_9 = arith.constant 0 : index
    %c0_10 = arith.constant 0 : index
    %10 = vector.load %arg4[%c0_9, %c0_10] : memref<1x32xf32, #tpu.memory_space<vmem>>, vector<1x32xf32>
    %11 = vector.broadcast %10 : vector<1x32xf32> to vector<8x32xf32>
    %12 = arith.addf %9, %11 : vector<8x32xf32>
    %cst_11 = arith.constant 0.000000e+00 : f32
    %13 = vector.broadcast %cst_11 : f32 to vector<8x32xf32>
    %14 = arith.maximumf %12, %13 : vector<8x32xf32>
    %c0_12 = arith.constant 0 : index
    %c0_13 = arith.constant 0 : index
    %15 = vector.load %arg5[%c0_12, %c0_13] : memref<8x32xf32, #tpu.memory_space<vmem>>, vector<8x32xf32>
    tpu.vector_store %arg5[%c0_12, %c0_13], %14 {strides = array<i32>} : memref<8x32xf32, #tpu.memory_space<vmem>>, vector<8x32xf32>,
    return
  }
}

</mosaic_0001>

<llo_original>
// kernel: tpu_custom_call.1
$region0: #{tpu_custom_call.1}
  #allocation0 [shape = 'u32[]', space=smem, size = 0x4, offset = 0x4, fixed_abs, tag = 'smem constant byte address 0x4 - core index']
  #allocation1 [shape = 'u32[72,128]{1,0:T(1,128)}', space=vmem, size = 0x9000, scoped, tag = 'internal scratch']
  %s0 = inlined_call_operand.vmem [shape: f32[8,32], index: 0, kind: input, shape index: {}]
  %s1 = inlined_call_operand.vmem [shape: f32[32,128], index: 1, kind: input, shape index: {}]
  %s2 = inlined_call_operand.vmem [shape: f32[1,128], index: 2, kind: input, shape index: {}]
  %s3 = inlined_call_operand.vmem [shape: f32[128,32], index: 3, kind: input, shape index: {}]
  %s4 = inlined_call_operand.vmem [shape: f32[1,32], index: 4, kind: input, shape index: {}]
  %s5 = inlined_call_operand.hbm [shape: f32[8,32], index: 5, kind: output, shape index: {}]
  %s6 = sld [smem:[#allocation0]]
  $region30: #{tpu_custom_call.1} parent=0
    _
  %s8 = ssub.s32 1, %s6
  %s9 = scalar_select 0, %s8, %s6
  $region1: #{tpu_custom_call.1} parent=0
    #allocation2 [shape = 'u8[4096]{0}', space=vmem, size = 0x1000, scoped, tag = 'output window, operand 0, single buffered']
    #allocation3 [shape = 's32[1]{0}', space=sflag, size = 0x4, scoped, tag = 'scoped memory for tpu_custom_call.1']
    %10 = vsyncpa [#allocation3], 0
    // Predicated region
    $region2: #{tpu_custom_call.1} parent=1 // pred_check
      _
    $region3: #{tpu_custom_call.1} parent=1 // pred_check_branch
      %12 = sbr.rel (0) target = $region5
    $region4: #{tpu_custom_call.1} parent=1 // pred_region
      _
    $region5: #{tpu_custom_call.1} parent=1 // pred_fallthru
      _
    // Predicated region
    $region6: #{tpu_custom_call.1} parent=1 // pred_check
      _
    $region7: #{tpu_custom_call.1} parent=1 // pred_check_branch
      %14 = sbr.rel (0) target = $region9
    $region8: #{tpu_custom_call.1} parent=1 // pred_region
      _
    $region9: #{tpu_custom_call.1} parent=1 // pred_fallthru
      _
    // Predicated region
    $region10: #{tpu_custom_call.1} parent=1 // pred_check
      _
    $region11: #{tpu_custom_call.1} parent=1 // pred_check_branch
      %16 = sbr.rel (0) target = $region13
    $region12: #{tpu_custom_call.1} parent=1 // pred_region
      _
    $region13: #{tpu_custom_call.1} parent=1 // pred_fallthru
      _
    // Predicated region
    $region14: #{tpu_custom_call.1} parent=1 // pred_check
      _
    $region15: #{tpu_custom_call.1} parent=1 // pred_check_branch
      %18 = sbr.rel (0) target = $region17
    $region16: #{tpu_custom_call.1} parent=1 // pred_region
      _
    $region17: #{tpu_custom_call.1} parent=1 // pred_fallthru
      _
    // Predicated region
    $region18: #{tpu_custom_call.1} parent=1 // pred_check
      _
    $region19: #{tpu_custom_call.1} parent=1 // pred_check_branch
      %20 = sbr.rel (0) target = $region21
    $region20: #{tpu_custom_call.1} parent=1 // pred_region
      _
    $region21: #{tpu_custom_call.1} parent=1 // pred_fallthru
      _
    %v21 = vld [vmem:[%s0] sm:$0xff]
    %v22 = vld [vmem:[%s1] sm:$0xff]
    %v23 = vld [vmem:[%s1 + $0x8] sm:$0xff]
    %v24 = vld [vmem:[%s1 + $0x10] sm:$0xff]
    %v25 = vld [vmem:[%s1 + $0x18] sm:$0xff]
    %v26 = vld [vmem:[%s2] sm:$0x1]
    %v28 = vperm.slane %v26, 0
    %vm30 = vcmask 261120
    %v32 = vsel %vm30, %v21, 0
    %34 = vmatpush.msra.mxu0 0.0
    %35 = vmatpush.msra.mxu0 0.0
    %36 = vmatpush.msra.mxu0 0.0
    %37 = vmatpush.msra.mxu0 0.0
    %38 = vmatpush.msra.mxu0 0.0
    %39 = vmatpush.msra.mxu0 0.0
    %40 = vmatpush.msra.mxu0 0.0
    %41 = vmatpush.msra.mxu0 0.0
    %42 = vmatpush.msra.mxu0 0.0
    %43 = vmatpush.msra.mxu0 0.0
    %44 = vmatpush.msra.mxu0 0.0
    %45 = vmatpush.msra.mxu0 0.0
    %46 = vmatpush.msra.mxu0 %v25
    %47 = vmatpush.msra.mxu0 %v24
    %48 = vmatpush.msra.mxu0 %v23
    %49 = vmatpush.msra.mxu0 %v22
    %50 = vmatmul.f32.gmra.mxu0 %v32
    %v51 = vpop.f32.mrf.mxu0
    %v52 = vadd.f32 %v28, %v51
    %53 = vdwg.mxu0
    %v54 = vmax.f32 %v52, 0.0
    %v55 = vld [vmem:[%s3] sm:$0xff]
    %v56 = vld [vmem:[%s3 + $0x8] sm:$0xff]
    %v57 = vld [vmem:[%s3 + $0x10] sm:$0xff]
    %v58 = vld [vmem:[%s3 + $0x18] sm:$0xff]
    %v59 = vld [vmem:[%s3 + $0x20] sm:$0xff]
    %v60 = vld [vmem:[%s3 + $0x28] sm:$0xff]
    %v61 = vld [vmem:[%s3 + $0x30] sm:$0xff]
    %v62 = vld [vmem:[%s3 + $0x38] sm:$0xff]
    %v63 = vld [vmem:[%s3 + $0x40] sm:$0xff]
    %v64 = vld [vmem:[%s3 + $0x48] sm:$0xff]
    %v65 = vld [vmem:[%s3 + $0x50] sm:$0xff]
    %v66 = vld [vmem:[%s3 + $0x58] sm:$0xff]
    %v67 = vld [vmem:[%s3 + $0x60] sm:$0xff]
    %v68 = vld [vmem:[%s3 + $0x68] sm:$0xff]
    %v69 = vld [vmem:[%s3 + $0x70] sm:$0xff]
    %v70 = vld [vmem:[%s3 + $0x78] sm:$0xff]
    %v71 = vld [vmem:[%s4] sm:$0x1]
    %v73 = vperm.slane %v71, 0
    %75 = vmatpush.msra.mxu0 %v70
    %76 = vmatpush.msra.mxu0 %v69
    %77 = vmatpush.msra.mxu0 %v68
    %78 = vmatpush.msra.mxu0 %v67
    %79 = vmatpush.msra.mxu0 %v66
    %80 = vmatpush.msra.mxu0 %v65
    %81 = vmatpush.msra.mxu0 %v64
    %82 = vmatpush.msra.mxu0 %v63
    %83 = vmatpush.msra.mxu0 %v62
    %84 = vmatpush.msra.mxu0 %v61
    %85 = vmatpush.msra.mxu0 %v60
    %86 = vmatpush.msra.mxu0 %v59
    %87 = vmatpush.msra.mxu0 %v58
    %88 = vmatpush.msra.mxu0 %v57
    %89 = vmatpush.msra.mxu0 %v56
    %90 = vmatpush.msra.mxu0 %v55
    %91 = vmatmul.f32.gmra.mxu0 %v54
    %v92 = vpop.f32.mrf.mxu0
    %v93 = vadd.f32 %v73, %v92
    %94 = vdwg.mxu0
    %v95 = vmax.f32 %v93, 0.0
    %96 = vst.msk [vmem:[#allocation2] sm:$0xff] %vm30, %v95
    // Predicated region
    $region22: #{tpu_custom_call.1} parent=1 // pred_check
      _
    $region23: #{tpu_custom_call.1} parent=1 // pred_check_branch
      %98 = sbr.rel (0) target = $region25
    $region24: #{tpu_custom_call.1} parent=1 // pred_region
      %100 = vsyncadd [#allocation3], 0
      %s102 = sshll.u32 [#allocation2], 4
      %s103 = int_to_ptr.vmem [resolvable:$true] %s102
      %s104 = sshll.u32 %s5, 4
      %s105 = int_to_ptr.hbm [resolvable:$true] %s104
      %107 = dma.vmem_to_hbm [thread:$0]  %s103, 128, %s105, [#allocation3]
    $region25: #{tpu_custom_call.1} parent=1 // pred_fallthru
      _
    // Predicated region
    $region26: #{tpu_custom_call.1} parent=1 // pred_check
      _
    $region27: #{tpu_custom_call.1} parent=1 // pred_check_branch
      %109 = sbr.rel (0) target = $region29
    $region28: #{tpu_custom_call.1} parent=1 // pred_region
      %111 = dma.done [#allocation3], 128
    $region29: #{tpu_custom_call.1} parent=1 // pred_fallthru
      _
    %112 = vsyncpa [#allocation3], 1

</llo_original>
